<compile_context>
chip_gen: v5e
topology: v5e:2x2
jax: 0.10.0
libtpu: 0.0.40
codegen_flags: <defaults>
</compile_context>

<pallas_src>
import functools

import jax
import jax.numpy as jnp
from jax import lax
from jax.experimental import pallas as pl
from jax.experimental.pallas import tpu as pltpu

HIDDEN = 128      # hidden width (matches nn.Linear(., 128))
LANE = 128        # TPU lane width
SUBLANE = 8       # f32 sublane height
SUB = 256         # in-kernel sub-block rows (bounds f32 intermediates / spills on v5e)


def _round_up(n, m):
    return (n + m - 1) // m * m


def _choose_tb(batch, block_b):
    """Batch tile: multiple of 8, >=2 grid steps when B allows (v7x megacore),
    and a whole number of SUB-row sub-blocks when larger than SUB."""
    block_b = max(SUBLANE, (int(block_b) // SUBLANE) * SUBLANE)
    tb = min(block_b, _round_up(max(1, -(-batch // 2)), SUBLANE))
    if tb > SUB:
        tb = _round_up(tb, SUB)   # may exceed block_b by < SUB; block_b is a hint
    return tb


def _dqn_kernel(x_ref, w1_ref, b1_ref, w2_ref, b2_ref, w3_ref, b3_ref, o_ref, *, sub):
    """One batch tile. Weights are VMEM-resident (constant index_maps); the tile is
    processed in `sub`-row chunks so f32 intermediates stay (close to) vreg-sized."""
    n_actions = o_ref.shape[-1]
    w1 = w1_ref[...]
    b1 = b1_ref[...]
    w2 = w2_ref[...]
    b2 = b2_ref[...]
    w3 = w3_ref[...]
    b3 = b3_ref[...]

    def compute(r0, rows):
        # f32 -> bf16 cast is VPU work that hides under the MXU.
        xs = x_ref[pl.ds(r0, rows), :].astype(jnp.bfloat16)
        h1 = jnp.maximum(
            jnp.dot(xs, w1, preferred_element_type=jnp.float32) + b1, 0.0)
        h2 = jnp.maximum(
            jnp.dot(h1.astype(jnp.bfloat16), w2,
                    preferred_element_type=jnp.float32) + b2, 0.0)
        out = jnp.dot(h2.astype(jnp.bfloat16), w3,
                      preferred_element_type=jnp.float32)
        # Only the real action columns are written back (masked vst; tiny HBM
        # writeback instead of a 128-wide f32 slab).
        o_ref[pl.ds(r0, rows), :] = (out[:, :n_actions] + b3).astype(o_ref.dtype)

    nsub = x_ref.shape[0] // sub
    if nsub <= 1:
        compute(0, x_ref.shape[0])
    else:
        def body(s, carry):
            compute(pl.multiple_of(s * sub, sub), sub)
            return carry
        lax.fori_loop(0, nsub, body, 0, unroll=True)


@functools.partial(jax.jit, static_argnames=("block_b",))
def dqn_forward(x, w1, b1, w2, b2, w3p, b3, *, block_b=1024):
    """x: [B, n_obs] f32. Params are pre-formatted by format_dqn_params():
    w1:[n_obs,128] bf16, b1:[1,128] f32, w2:[128,128] bf16, b2:[1,128] f32,
    w3p:[128,A_pad] bf16 (lane-padded), b3:[1,n_actions] f32.
    Returns [B, n_actions] f32."""
    B, K = x.shape
    A_pad = w3p.shape[1]
    n_actions = b3.shape[1]

    tb = _choose_tb(B, block_b)
    sub = min(tb, SUB)
    grid = (pl.cdiv(B, tb),)   # last block may overhang; OOB output rows are dropped

    kernel = functools.partial(_dqn_kernel, sub=sub)

    return pl.pallas_call(
        kernel,
        out_shape=jax.ShapeDtypeStruct((B, n_actions), jnp.float32),
        grid=grid,
        in_specs=[
            # batch-tiled activations; K equals the full array dim (no pad, no copy)
            pl.BlockSpec((tb, K), lambda i: (i, 0)),
            # weights / biases: constant blocks stay VMEM-resident across grid steps
            pl.BlockSpec((K, HIDDEN), lambda i: (0, 0)),
            pl.BlockSpec((1, HIDDEN), lambda i: (0, 0)),
            pl.BlockSpec((HIDDEN, HIDDEN), lambda i: (0, 0)),
            pl.BlockSpec((1, HIDDEN), lambda i: (0, 0)),
            pl.BlockSpec((HIDDEN, A_pad), lambda i: (0, 0)),
            pl.BlockSpec((1, n_actions), lambda i: (0, 0)),
        ],
        out_specs=pl.BlockSpec((tb, n_actions), lambda i: (i, 0)),
        compiler_params=pltpu.CompilerParams(
            dimension_semantics=("parallel",),   # megacore on v7x, no-op elsewhere
        ),
    )(x, w1, b1, w2, b2, w3p, b3)


def format_dqn_params(w1, b1, w2, b2, w3, b3):
    """One-time parameter prep (hoisted out of the per-call forward):
    bf16 weights, f32 biases, w3 lane-padded to a multiple of 128 columns so the
    last matmul stays a full-lane MXU op. Call once after init / optimizer step."""
    n_actions = w3.shape[1]
    a_pad = _round_up(n_actions, LANE)
    w3p = jnp.zeros((w3.shape[0], a_pad), jnp.bfloat16).at[:, :n_actions].set(
        w3.astype(jnp.bfloat16))
    return (w1.astype(jnp.bfloat16), b1.astype(jnp.float32),
            w2.astype(jnp.bfloat16), b2.astype(jnp.float32),
            w3p, b3.astype(jnp.float32))


def init_dqn_params(key, n_observations, n_actions, hidden=HIDDEN):
    """Deterministic init matching nn.Linear's U(-1/sqrt(fan_in), 1/sqrt(fan_in))."""
    def linear(k, fan_in, fan_out):
        kw, kb = jax.random.split(k)
        bound = 1.0 / jnp.sqrt(fan_in)
        w = jax.random.uniform(kw, (fan_in, fan_out), jnp.float32, -bound, bound)
        b = jax.random.uniform(kb, (1, fan_out), jnp.float32, -bound, bound)
        return w, b

    k1, k2, k3 = jax.random.split(key, 3)
    w1, b1 = linear(k1, n_observations, hidden)
    w2, b2 = linear(k2, hidden, hidden)
    w3, b3 = linear(k3, hidden, n_actions)
    return w1, b1, w2, b2, w3, b3


def dqn_reference(x, w1, b1, w2, b2, w3, b3):
    """Reference with the same bf16-weight / f32-accumulate numerics as the kernel."""
    xb = x.astype(jnp.bfloat16)
    w1b, w2b, w3b = (w.astype(jnp.bfloat16) for w in (w1, w2, w3))
    h1 = jnp.maximum(
        jnp.dot(xb, w1b, preferred_element_type=jnp.float32) + b1, 0.0)
    h2 = jnp.maximum(
        jnp.dot(h1.astype(jnp.bfloat16), w2b, preferred_element_type=jnp.float32)
        + b2, 0.0)
    return jnp.dot(h2.astype(jnp.bfloat16), w3b,
                   preferred_element_type=jnp.float32) + b3


if __name__ == "__main__":
    key = jax.random.PRNGKey(0)
    n_observations, n_actions = 4, 2

    kp, kx = jax.random.split(key)
    params = init_dqn_params(kp, n_observations, n_actions)
    fmt = format_dqn_params(*params)   # done once, not per forward call

    # Small batch (single grid step).
    x_small = jax.random.normal(kx, (8, n_observations), jnp.float32)
    out_small = jax.block_until_ready(dqn_forward(x_small, *fmt))
    ref_small = dqn_reference(x_small, *params)
    assert out_small.shape == (8, n_actions)
    assert jnp.allclose(out_small, ref_small, atol=5e-2, rtol=5e-2), \
        "mismatch vs reference (small batch)"

    # Non-multiple batch: 2 grid steps, last block overhangs the array.
    x_med = jax.random.normal(kx, (300, n_observations), jnp.float32)
    out_med = jax.block_until_ready(dqn_forward(x_med, *fmt))
    ref_med = dqn_reference(x_med, *params)
    assert out_med.shape == (300, n_actions)
    assert jnp.allclose(out_med, ref_med, atol=5e-2, rtol=5e-2), \
        "mismatch vs reference (overhanging batch)"

    # Larger batch: exercises the in-kernel sub-block loop + grid pipelining.
    x_big = jax.random.normal(kx, (600, n_observations), jnp.float32)
    out_big = jax.block_until_ready(dqn_forward(x_big, *fmt, block_b=512))
    ref_big = dqn_reference(x_big, *params)
    assert out_big.shape == (600, n_actions)
    assert jnp.allclose(out_big, ref_big, atol=5e-2, rtol=5e-2), \
        "mismatch vs reference (sub-blocked batch)"

    print("KERNEL_OK")
</pallas_src>

<mosaic_0001>
module attributes {stable_mosaic.version = 11 : i64} {
  func.func @_dqn_kernel(%arg0: i32, %arg1: memref<8x4xf32, #tpu.memory_space<vmem>>, %arg2: memref<4x128xbf16, #tpu.memory_space<vmem>>, %arg3: memref<1x128xf32, #tpu.memory_space<vmem>>, %arg4: memref<128x128xbf16, #tpu.memory_space<vmem>>, %arg5: memref<1x128xf32, #tpu.memory_space<vmem>>, %arg6: memref<128x128xbf16, #tpu.memory_space<vmem>>, %arg7: memref<1x2xf32, #tpu.memory_space<vmem>>, %arg8: memref<8x2xf32, #tpu.memory_space<vmem>>) attributes {dimension_semantics = [#tpu.dimension_semantics<parallel>], iteration_bounds = array<i64: 1>, scalar_prefetch = 0 : i64, scratch_operands = 0 : i64, tpu.core_type = #tpu.core_type<tc>, window_params = [{transform_indices = @transform_0, window_bounds = array<i64: 8, 4>}, {pipeline_mode = #tpu.pipeline_mode<synchronous>, transform_indices = @transform_1, window_bounds = array<i64: 4, 128>}, {pipeline_mode = #tpu.pipeline_mode<synchronous>, transform_indices = @transform_2, window_bounds = array<i64: 1, 128>}, {pipeline_mode = #tpu.pipeline_mode<synchronous>, transform_indices = @transform_3, window_bounds = array<i64: 128, 128>}, {pipeline_mode = #tpu.pipeline_mode<synchronous>, transform_indices = @transform_4, window_bounds = array<i64: 1, 128>}, {pipeline_mode = #tpu.pipeline_mode<synchronous>, transform_indices = @transform_5, window_bounds = array<i64: 128, 128>}, {pipeline_mode = #tpu.pipeline_mode<synchronous>, transform_indices = @transform_6, window_bounds = array<i64: 1, 2>}, {transform_indices = @transform_7, window_bounds = array<i64: 8, 2>}]} {
    %c0 = arith.constant 0 : index
    %c0_0 = arith.constant 0 : index
    %0 = vector.load %arg2[%c0, %c0_0] : memref<4x128xbf16, #tpu.memory_space<vmem>>, vector<4x128xbf16>
    %c0_1 = arith.constant 0 : index
    %c0_2 = arith.constant 0 : index
    %1 = vector.load %arg3[%c0_1, %c0_2] : memref<1x128xf32, #tpu.memory_space<vmem>>, vector<1x128xf32>
    %c0_3 = arith.constant 0 : index
    %c0_4 = arith.constant 0 : index
    %2 = vector.load %arg4[%c0_3, %c0_4] : memref<128x128xbf16, #tpu.memory_space<vmem>>, vector<128x128xbf16>
    %c0_5 = arith.constant 0 : index
    %c0_6 = arith.constant 0 : index
    %3 = vector.load %arg5[%c0_5, %c0_6] : memref<1x128xf32, #tpu.memory_space<vmem>>, vector<1x128xf32>
    %c0_7 = arith.constant 0 : index
    %c0_8 = arith.constant 0 : index
    %4 = vector.load %arg6[%c0_7, %c0_8] : memref<128x128xbf16, #tpu.memory_space<vmem>>, vector<128x128xbf16>
    %c0_9 = arith.constant 0 : index
    %c0_10 = arith.constant 0 : index
    %5 = vector.load %arg7[%c0_9, %c0_10] : memref<1x2xf32, #tpu.memory_space<vmem>>, vector<1x2xf32>
    %c0_11 = arith.constant 0 : index
    %c0_12 = arith.constant 0 : index
    %6 = vector.load %arg1[%c0_11, %c0_12] : memref<8x4xf32, #tpu.memory_space<vmem>>, vector<8x4xf32>
    %7 = arith.truncf %6 : vector<8x4xf32> to vector<8x4xbf16>
    %cst = arith.constant dense<0.000000e+00> : vector<8x128xf32>
    %8 = tpu.matmul %7, %0, %cst {dimension_numbers = #tpu.dot_dimension_numbers<[1], [0], [0], [1], [0, 0, 1, 1], [], []>} : vector<8x4xbf16>, vector<4x128xbf16>, vector<8x128xf32> -> vector<8x128xf32>
    %9 = vector.broadcast %1 : vector<1x128xf32> to vector<8x128xf32>
    %10 = arith.addf %8, %9 : vector<8x128xf32>
    %cst_13 = arith.constant 0.000000e+00 : f32
    %11 = vector.broadcast %cst_13 : f32 to vector<8x128xf32>
    %12 = arith.maximumf %10, %11 : vector<8x128xf32>
    %13 = arith.truncf %12 : vector<8x128xf32> to vector<8x128xbf16>
    %cst_14 = arith.constant dense<0.000000e+00> : vector<8x128xf32>
    %14 = tpu.matmul %13, %2, %cst_14 {dimension_numbers = #tpu.dot_dimension_numbers<[1], [0], [0], [1], [0, 0, 1, 1], [], []>} : vector<8x128xbf16>, vector<128x128xbf16>, vector<8x128xf32> -> vector<8x128xf32>
    %15 = vector.broadcast %3 : vector<1x128xf32> to vector<8x128xf32>
    %16 = arith.addf %14, %15 : vector<8x128xf32>
    %cst_15 = arith.constant 0.000000e+00 : f32
    %17 = vector.broadcast %cst_15 : f32 to vector<8x128xf32>
    %18 = arith.maximumf %16, %17 : vector<8x128xf32>
    %19 = arith.truncf %18 : vector<8x128xf32> to vector<8x128xbf16>
    %cst_16 = arith.constant dense<0.000000e+00> : vector<8x128xf32>
    %20 = tpu.matmul %19, %4, %cst_16 {dimension_numbers = #tpu.dot_dimension_numbers<[1], [0], [0], [1], [0, 0, 1, 1], [], []>} : vector<8x128xbf16>, vector<128x128xbf16>, vector<8x128xf32> -> vector<8x128xf32>
    %21 = vector.extract_strided_slice %20 {offsets = [0, 0], sizes = [8, 2], strides = [1, 1]} : vector<8x128xf32> to vector<8x2xf32>
    %22 = vector.broadcast %5 : vector<1x2xf32> to vector<8x2xf32>
    %23 = arith.addf %21, %22 : vector<8x2xf32>
    %c0_17 = arith.constant 0 : index
    %c0_18 = arith.constant 0 : index
    %24 = vector.load %arg8[%c0_17, %c0_18] : memref<8x2xf32, #tpu.memory_space<vmem>>, vector<8x2xf32>
    tpu.vector_store %arg8[%c0_17, %c0_18], %23 {strides = array<i32>} : memref<8x2xf32, #tpu.memory_space<vmem>>, vector<8x2xf32>,
    return
  }
  func.func @transform_0(%arg0: i32) -> (i32, i32) {
    %c0_i32 = arith.constant 0 : i32
    %c0_i32_0 = arith.constant 0 : i32
    return %arg0, %c0_i32 : i32, i32
  }
  func.func @transform_1(%arg0: i32) -> (i32, i32) {
    %c0_i32 = arith.constant 0 : i32
    %c0_i32_0 = arith.constant 0 : i32
    %c0_i32_1 = arith.constant 0 : i32
    return %c0_i32, %c0_i32_0 : i32, i32
  }
  func.func @transform_2(%arg0: i32) -> (i32, i32) {
    %c0_i32 = arith.constant 0 : i32
    %c0_i32_0 = arith.constant 0 : i32
    %c0_i32_1 = arith.constant 0 : i32
    return %c0_i32, %c0_i32_0 : i32, i32
  }
  func.func @transform_3(%arg0: i32) -> (i32, i32) {
    %c0_i32 = arith.constant 0 : i32
    %c0_i32_0 = arith.constant 0 : i32
    %c0_i32_1 = arith.constant 0 : i32
    return %c0_i32, %c0_i32_0 : i32, i32
  }
  func.func @transform_4(%arg0: i32) -> (i32, i32) {
    %c0_i32 = arith.constant 0 : i32
    %c0_i32_0 = arith.constant 0 : i32
    %c0_i32_1 = arith.constant 0 : i32
    return %c0_i32, %c0_i32_0 : i32, i32
  }
  func.func @transform_5(%arg0: i32) -> (i32, i32) {
    %c0_i32 = arith.constant 0 : i32
    %c0_i32_0 = arith.constant 0 : i32
    %c0_i32_1 = arith.constant 0 : i32
    return %c0_i32, %c0_i32_0 : i32, i32
  }
  func.func @transform_6(%arg0: i32) -> (i32, i32) {
    %c0_i32 = arith.constant 0 : i32
    %c0_i32_0 = arith.constant 0 : i32
    %c0_i32_1 = arith.constant 0 : i32
    return %c0_i32, %c0_i32_0 : i32, i32
  }
  func.func @transform_7(%arg0: i32) -> (i32, i32) {
    %c0_i32 = arith.constant 0 : i32
    %c0_i32_0 = arith.constant 0 : i32
    return %arg0, %c0_i32 : i32, i32
  }
}

</mosaic_0001>

<llo_original>
// kernel: dqn_forward.1
$region0: #{dqn_forward.1}
  #allocation0 [shape = 'u32[]', space=smem, size = 0x4, offset = 0x4, fixed_abs, tag = 'smem constant byte address 0x4 - core index']
  #allocation1 [shape = 'u32[72,128]{1,0:T(1,128)}', space=vmem, size = 0x9000, scoped, tag = 'internal scratch']
  %s0 = inlined_call_operand.vmem [shape: f32[8,4], index: 0, kind: input, shape index: {}]
  %s1 = inlined_call_operand.vmem [shape: bf16[4,128], index: 1, kind: input, shape index: {}]
  %s2 = inlined_call_operand.vmem [shape: f32[1,128], index: 2, kind: input, shape index: {}]
  %s3 = inlined_call_operand.hbm [shape: bf16[128,128], index: 3, kind: input, shape index: {}]
  %s4 = inlined_call_operand.vmem [shape: f32[1,128], index: 4, kind: input, shape index: {}]
  %s5 = inlined_call_operand.hbm [shape: bf16[128,128], index: 5, kind: input, shape index: {}]
  %s6 = inlined_call_operand.vmem [shape: f32[1,2], index: 6, kind: input, shape index: {}]
  %s7 = inlined_call_operand.vmem [shape: f32[8,2], index: 7, kind: output, shape index: {}]
  %s8 = sld [smem:[#allocation0]]
  $region46: #{dqn_forward.1} parent=0
    _
  %s10 = ssub.s32 1, %s8
  %s11 = scalar_select 0, %s10, %s8
  $region1: #{dqn_forward.1} parent=0
    #allocation2 [shape = 'u8[32768]{0}', space=vmem, size = 0x8000, scoped, tag = 'input window, operand 3, single buffered']
    #allocation3 [shape = 's32[1]{0}', space=sflag, size = 0x4, scoped, tag = 'scoped memory for dqn_forward.1']
    #allocation4 [shape = 'u8[32768]{0}', space=vmem, size = 0x8000, scoped, tag = 'input window, operand 5, single buffered']
    #allocation5 [shape = 's32[1]{0}', space=sflag, size = 0x4, scoped, tag = 'scoped memory for dqn_forward.1']
    %12 = vsyncpa [#allocation3], 0
    %13 = vsyncpa [#allocation5], 0
    // Predicated region
    $region2: #{dqn_forward.1} parent=1 // pred_check
      _
    $region3: #{dqn_forward.1} parent=1 // pred_check_branch
      %15 = sbr.rel (0) target = $region5
    $region4: #{dqn_forward.1} parent=1 // pred_region
      _
    $region5: #{dqn_forward.1} parent=1 // pred_fallthru
      _
    // Predicated region
    $region6: #{dqn_forward.1} parent=1 // pred_check
      _
    $region7: #{dqn_forward.1} parent=1 // pred_check_branch
      %17 = sbr.rel (0) target = $region9
    $region8: #{dqn_forward.1} parent=1 // pred_region
      _
    $region9: #{dqn_forward.1} parent=1 // pred_fallthru
      _
    // Predicated region
    $region10: #{dqn_forward.1} parent=1 // pred_check
      _
    $region11: #{dqn_forward.1} parent=1 // pred_check_branch
      %19 = sbr.rel (0) target = $region13
    $region12: #{dqn_forward.1} parent=1 // pred_region
      _
    $region13: #{dqn_forward.1} parent=1 // pred_fallthru
      _
    // Predicated region
    $region14: #{dqn_forward.1} parent=1 // pred_check
      _
    $region15: #{dqn_forward.1} parent=1 // pred_check_branch
      %21 = sbr.rel (0) target = $region17
    $region16: #{dqn_forward.1} parent=1 // pred_region
      %23 = vsyncadd [#allocation3], 0
      %s24 = sshll.u32 %s3, 4
      %s25 = int_to_ptr.hbm [resolvable:$true] %s24
      %s26 = sshll.u32 [#allocation2], 4
      %s27 = int_to_ptr.vmem [resolvable:$true] %s26
      %32 = dma.hbm_to_vmem [thread:$0]  %s25, 1024, %s27, [#allocation3], 64, 64, 4
    $region17: #{dqn_forward.1} parent=1 // pred_fallthru
      _
    // Predicated region
    $region18: #{dqn_forward.1} parent=1 // pred_check
      _
    $region19: #{dqn_forward.1} parent=1 // pred_check_branch
      %34 = sbr.rel (0) target = $region21
    $region20: #{dqn_forward.1} parent=1 // pred_region
      _
    $region21: #{dqn_forward.1} parent=1 // pred_fallthru
      _
    // Predicated region
    $region22: #{dqn_forward.1} parent=1 // pred_check
      _
    $region23: #{dqn_forward.1} parent=1 // pred_check_branch
      %36 = sbr.rel (0) target = $region25
    $region24: #{dqn_forward.1} parent=1 // pred_region
      %38 = vsyncadd [#allocation5], 0
      %s39 = sshll.u32 %s5, 4
      %s40 = int_to_ptr.hbm [resolvable:$true] %s39
      %s41 = sshll.u32 [#allocation4], 4
      %s42 = int_to_ptr.vmem [resolvable:$true] %s41
      %47 = dma.hbm_to_vmem [thread:$0]  %s40, 1024, %s42, [#allocation5], 64, 64, 4
    $region25: #{dqn_forward.1} parent=1 // pred_fallthru
      _
    // Predicated region
    $region26: #{dqn_forward.1} parent=1 // pred_check
      _
    $region27: #{dqn_forward.1} parent=1 // pred_check_branch
      %49 = sbr.rel (0) target = $region29
    $region28: #{dqn_forward.1} parent=1 // pred_region
      _
    $region29: #{dqn_forward.1} parent=1 // pred_fallthru
      _
    // Predicated region
    $region30: #{dqn_forward.1} parent=1 // pred_check
      _
    $region31: #{dqn_forward.1} parent=1 // pred_check_branch
      %51 = sbr.rel (0) target = $region33
    $region32: #{dqn_forward.1} parent=1 // pred_region
      %53 = dma.done [#allocation3], 1024
    $region33: #{dqn_forward.1} parent=1 // pred_fallthru
      _
    // Predicated region
    $region34: #{dqn_forward.1} parent=1 // pred_check
      _
    $region35: #{dqn_forward.1} parent=1 // pred_check_branch
      %55 = sbr.rel (0) target = $region37
    $region36: #{dqn_forward.1} parent=1 // pred_region
      %57 = dma.done [#allocation5], 1024
    $region37: #{dqn_forward.1} parent=1 // pred_fallthru
      _
    %v59 = vld [vmem:[%s1] sm:$0x3]
    %v60 = vld [vmem:[%s2] sm:$0x1]
    %v61 = vld [vmem:[#allocation2] sm:$0xf]
    %v62 = vld [vmem:[#allocation2 + $0x4] sm:$0xf]
    %v63 = vld [vmem:[#allocation2 + $0x8] sm:$0xf]
    %v64 = vld [vmem:[#allocation2 + $0xc] sm:$0xf]
    %v65 = vld [vmem:[#allocation2 + $0x10] sm:$0xf]
    %v66 = vld [vmem:[#allocation2 + $0x14] sm:$0xf]
    %v67 = vld [vmem:[#allocation2 + $0x18] sm:$0xf]
    %v68 = vld [vmem:[#allocation2 + $0x1c] sm:$0xf]
    %v69 = vld [vmem:[#allocation2 + $0x20] sm:$0xf]
    %v70 = vld [vmem:[#allocation2 + $0x24] sm:$0xf]
    %v71 = vld [vmem:[#allocation2 + $0x28] sm:$0xf]
    %v72 = vld [vmem:[#allocation2 + $0x2c] sm:$0xf]
    %v73 = vld [vmem:[#allocation2 + $0x30] sm:$0xf]
    %v74 = vld [vmem:[#allocation2 + $0x34] sm:$0xf]
    %v75 = vld [vmem:[#allocation2 + $0x38] sm:$0xf]
    %v76 = vld [vmem:[#allocation2 + $0x3c] sm:$0xf]
    %v77 = vld [vmem:[%s4] sm:$0x1]
    %v78 = vld [vmem:[#allocation4] sm:$0xf]
    %v79 = vld [vmem:[#allocation4 + $0x4] sm:$0xf]
    %v80 = vld [vmem:[#allocation4 + $0x8] sm:$0xf]
    %v81 = vld [vmem:[#allocation4 + $0xc] sm:$0xf]
    %v82 = vld [vmem:[#allocation4 + $0x10] sm:$0xf]
    %v83 = vld [vmem:[#allocation4 + $0x14] sm:$0xf]
    %v84 = vld [vmem:[#allocation4 + $0x18] sm:$0xf]
    %v85 = vld [vmem:[#allocation4 + $0x1c] sm:$0xf]
    %v86 = vld [vmem:[#allocation4 + $0x20] sm:$0xf]
    %v87 = vld [vmem:[#allocation4 + $0x24] sm:$0xf]
    %v88 = vld [vmem:[#allocation4 + $0x28] sm:$0xf]
    %v89 = vld [vmem:[#allocation4 + $0x2c] sm:$0xf]
    %v90 = vld [vmem:[#allocation4 + $0x30] sm:$0xf]
    %v91 = vld [vmem:[#allocation4 + $0x34] sm:$0xf]
    %v92 = vld [vmem:[#allocation4 + $0x38] sm:$0xf]
    %v93 = vld [vmem:[#allocation4 + $0x3c] sm:$0xf]
    %v94 = vld [vmem:[%s6] sm:$0x1]
    %v95 = vld [vmem:[%s0] sm:$0xff]
    %v96 = vpack.c.bf16 %v95, %v95
    %v98 = vperm.slane %v60, 0
    %vm100 = vcmask 31744
    %v102 = vsel %vm100, %v96, 0
    %vm104 = vcmask 1041408
    %v106 = vsel %vm104, %v59, 0
    %108 = vmatpush.bf16.msra.mxu0 0
    %109 = vmatpush.bf16.msra.mxu0 0
    %110 = vmatpush.bf16.msra.mxu0 0
    %111 = vmatpush.bf16.msra.mxu0 0
    %112 = vmatpush.bf16.msra.mxu0 0
    %113 = vmatpush.bf16.msra.mxu0 0
    %114 = vmatpush.bf16.msra.mxu0 0
    %115 = vmatpush.bf16.msra.mxu0 %v106
    %116 = vmatmul.bf16.gmra.mxu0 %v102
    %v117 = vpop.f32.mrf.mxu0
    %v118 = vadd.f32 %v98, %v117
    %v119 = vpop.f32.mrf.mxu0
    %120 = vdwg.mxu0
    %v121 = vmax.f32 %v118, 0.0
    %v122 = vpack.c.bf16 %v121, %v121
    %v124 = vperm.slane %v77, 0
    %v142 = vunpack.c.l.b16 %v61
    %v143 = vunpack.c.l.b16 %v62
    %v144 = vunpack.c.l.b16 %v63
    %v145 = vunpack.c.l.b16 %v64
    %v146 = vunpack.c.l.b16 %v65
    %v147 = vunpack.c.l.b16 %v66
    %v148 = vunpack.c.l.b16 %v67
    %v149 = vunpack.c.l.b16 %v68
    %v150 = vunpack.c.l.b16 %v69
    %v151 = vunpack.c.l.b16 %v70
    %v152 = vunpack.c.l.b16 %v71
    %v153 = vunpack.c.l.b16 %v72
    %v154 = vunpack.c.l.b16 %v73
    %v155 = vunpack.c.l.b16 %v74
    %v156 = vunpack.c.l.b16 %v75
    %v157 = vunpack.c.l.b16 %v76
    %v158 = vpack.c.b16 %v143, %v142
    %v159 = vpack.c.b16 %v145, %v144
    %v160 = vpack.c.b16 %v147, %v146
    %v161 = vpack.c.b16 %v149, %v148
    %v162 = vpack.c.b16 %v151, %v150
    %v163 = vpack.c.b16 %v153, %v152
    %v164 = vpack.c.b16 %v155, %v154
    %v165 = vpack.c.b16 %v157, %v156
    %174 = vmatpush.bf16.msra.mxu0 %v165
    %175 = vmatpush.bf16.msra.mxu0 %v164
    %176 = vmatpush.bf16.msra.mxu0 %v163
    %177 = vmatpush.bf16.msra.mxu0 %v162
    %178 = vmatpush.bf16.msra.mxu0 %v161
    %179 = vmatpush.bf16.msra.mxu0 %v160
    %180 = vmatpush.bf16.msra.mxu0 %v159
    %181 = vmatpush.bf16.msra.mxu0 %v158
    %182 = vmatmul.bf16.gmra.mxu0 %v122
    %v183 = vpop.f32.mrf.mxu0
    %v184 = vadd.f32 %v124, %v183
    %v185 = vpop.f32.mrf.mxu0
    %186 = vdwg.mxu0
    %v187 = vmax.f32 %v184, 0.0
    %v188 = vpack.c.bf16 %v187, %v187
    %v205 = vunpack.c.l.b16 %v78
    %v206 = vunpack.c.l.b16 %v79
    %v207 = vunpack.c.l.b16 %v80
    %v208 = vunpack.c.l.b16 %v81
    %v209 = vunpack.c.l.b16 %v82
    %v210 = vunpack.c.l.b16 %v83
    %v211 = vunpack.c.l.b16 %v84
    %v212 = vunpack.c.l.b16 %v85
    %v213 = vunpack.c.l.b16 %v86
    %v214 = vunpack.c.l.b16 %v87
    %v215 = vunpack.c.l.b16 %v88
    %v216 = vunpack.c.l.b16 %v89
    %v217 = vunpack.c.l.b16 %v90
    %v218 = vunpack.c.l.b16 %v91
    %v219 = vunpack.c.l.b16 %v92
    %v220 = vunpack.c.l.b16 %v93
    %v221 = vpack.c.b16 %v206, %v205
    %v222 = vpack.c.b16 %v208, %v207
    %v223 = vpack.c.b16 %v210, %v209
    %v224 = vpack.c.b16 %v212, %v211
    %v225 = vpack.c.b16 %v214, %v213
    %v226 = vpack.c.b16 %v216, %v215
    %v227 = vpack.c.b16 %v218, %v217
    %v228 = vpack.c.b16 %v220, %v219
    %237 = vmatpush.bf16.msra.mxu0 %v228
    %238 = vmatpush.bf16.msra.mxu0 %v227
    %239 = vmatpush.bf16.msra.mxu0 %v226
    %240 = vmatpush.bf16.msra.mxu0 %v225
    %241 = vmatpush.bf16.msra.mxu0 %v224
    %242 = vmatpush.bf16.msra.mxu0 %v223
    %243 = vmatpush.bf16.msra.mxu0 %v222
    %244 = vmatpush.bf16.msra.mxu0 %v221
    %245 = vmatmul.bf16.gmra.mxu0 %v188
    %v246 = vpop.f32.mrf.mxu0
    %v247 = vadd.f32 0.0, %v246
    %v248 = vpop.f32.mrf.mxu0
    %249 = vdwg.mxu0
    %v251 = vperm.slane %v94, 0
    %v253 = vadd.f32 %v247, %v251
    %vm254 = vcmask 15360
    %255 = vst.msk [vmem:[%s7] sm:$0xff] %vm254, %v253
    // Predicated region
    $region38: #{dqn_forward.1} parent=1 // pred_check
      _
    $region39: #{dqn_forward.1} parent=1 // pred_check_branch
      %257 = sbr.rel (0) target = $region41
    $region40: #{dqn_forward.1} parent=1 // pred_region
      _
    $region41: #{dqn_forward.1} parent=1 // pred_fallthru
      _
    // Predicated region
    $region42: #{dqn_forward.1} parent=1 // pred_check
      _
    $region43: #{dqn_forward.1} parent=1 // pred_check_branch
      %259 = sbr.rel (0) target = $region45
    $region44: #{dqn_forward.1} parent=1 // pred_region
      _
    $region45: #{dqn_forward.1} parent=1 // pred_fallthru
      _
    %260 = vsyncpa [#allocation3], 1
    %261 = vsyncpa [#allocation5], 1

</llo_original>
